<compile_context>
chip_gen: v5e
topology: v5e:2x2
jax: 0.10.0
libtpu: 0.0.40
codegen_flags: <defaults>
</compile_context>

<pallas_src>
import jax
import jax.numpy as jnp
from jax.experimental import pallas as pl
from jax.experimental.pallas import tpu as pltpu


def attention_kernel(enc_ref, hid_ref,
                     w_enc_ref, w_hidbeta_ref, b_hidbeta_ref, w_comb_ref,
                     out_ref, alpha_ref):
    TB, N, E = enc_ref.shape
    A = w_enc_ref.shape[1]

    enc = enc_ref[...]          # native dtype (bf16 or f32); never upcast the big tile
    hid = hid_ref[...]

    # encoderAttentionLayer: one (TB*N, E) @ (E, A) MXU matmul, f32 accumulation.
    # b_enc is folded into the hidden-side bias in the wrapper (it broadcasts
    # over N), so there is no (TB*N, A) bias add here.
    enc_att = jnp.dot(enc.reshape(TB * N, E), w_enc_ref[...],
                      preferred_element_type=jnp.float32).reshape(TB, N, A)

    # hiddenAttentionLayer and beta fused into a single (TB, H) @ (H, A+E) matmul.
    hid_proj = jnp.dot(hid, w_hidbeta_ref[...],
                       preferred_element_type=jnp.float32) + b_hidbeta_ref[...]
    hid_att = hid_proj[:, :A]          # (TB, A)  (includes b_enc + b_hid)
    beta_logits = hid_proj[:, A:]      # (TB, E)

    # relu(encA + hidA.unsqueeze(1)) — f32 VPU work (v5e has no bf16 VALU).
    s = jnp.maximum(enc_att + hid_att[:, None, :], 0.0)            # (TB, N, A)

    # combineAttentionLayer as a VPU multiply + lane (XLU) reduction.
    # b_comb is dropped: adding a per-row constant before softmax is a no-op.
    comb = jnp.sum(s * w_comb_ref[...].reshape(1, 1, A), axis=-1)   # (TB, N)

    # softmax over N with an exact denominator (alpha rows sum to 1).
    m = jnp.max(comb, axis=-1, keepdims=True)
    e = jnp.exp(comb - m)
    alpha = e / jnp.sum(e, axis=-1, keepdims=True)                  # (TB, N) f32

    # (encoder_out * alpha.unsqueeze(2)).sum(dim=1) on the MXU:
    # batched (1, N) @ (N, E), f32 accumulation — avoids a TB*N*E f32
    # VPU intermediate and consumes the encoder block in its native dtype.
    weighted = jnp.einsum('bqn,bne->bqe',
                          alpha[:, None, :].astype(enc.dtype), enc,
                          preferred_element_type=jnp.float32)[:, 0, :]   # (TB, E)

    beta_gate = jax.nn.sigmoid(beta_logits)                         # (TB, E)
    out_ref[...] = (beta_gate * weighted).astype(out_ref.dtype)
    alpha_ref[...] = alpha.astype(alpha_ref.dtype)


def _tpu_vmem_capacity_bytes():
    """Per-core VMEM capacity; conservative 64 MiB (v7x) fallback if unknown."""
    try:
        return int(pltpu.get_tpu_info().vmem_capacity_bytes)
    except Exception:
        return 64 << 20


def _generation_budgets():
    """(enc_tile_budget, row_cap, vmem_limit_cap) sized per TPU generation."""
    cap = _tpu_vmem_capacity_bytes()
    if cap >= (100 << 20):                 # 128 MiB parts: v5e / v6e
        return 48 << 20, 4096, 100 << 20
    # 64 MiB per TensorCore (v7x) — also the safe default when capacity is unknown.
    return 14 << 20, 2048, 48 << 20


def _batch_tile_candidates(B):
    # Sublane-friendly candidates: multiples of 8 that divide B, plus B itself.
    return sorted({d for d in range(8, B + 1, 8) if B % d == 0} | {B})


def _pick_batch_tile(cands, B, N, E, itemsize, enc_budget, row_cap, min_steps=2):
    def fits(tb):
        return 2 * tb * N * E * itemsize <= enc_budget and tb * N <= row_cap
    # Prefer tiles that leave >= min_steps grid steps: keeps v7x's second
    # TensorCore busy (batch axis is "parallel") and gives DMA/compute overlap.
    preferred = [tb for tb in cands if fits(tb) and B // tb >= min_steps]
    fitting = [tb for tb in cands if fits(tb)]
    if preferred:
        return max(preferred)
    if fitting:
        return max(fitting)
    return min(cands)


def _vmem_estimate(TB, N, E, H, A, enc_isz, hid_isz, w_isz, out_isz):
    AE = A + E
    weights = (E * A + H * AE) * w_isz + (AE + A) * 4          # resident weights/biases
    io = (2 * (TB * N * E * enc_isz + TB * H * hid_isz)        # double-buffered inputs
          + 2 * (TB * E * out_isz + TB * N * 4)                # double-buffered outputs
          + 2 * weights)                                       # weights (default dbl-buf)
    inter = (2 * TB * N * A + 3 * TB * N + TB * AE + 2 * TB * E) * 4
    return io + inter


def attention_forward(encoder_out, hidden, params, *, batch_tile=None):
    """encoder_out: (B, N, E), hidden: (B, H).
    Returns (weighted (B, E) in encoder_out.dtype, alpha (B, N) in float32)."""
    B, N, E = encoder_out.shape
    _, H = hidden.shape
    A = params["w_enc"].shape[1]
    AE = A + E

    # bf16 inputs -> true bf16 x bf16 MXU dots (f32 accumulation); otherwise f32.
    mxu_dtype = jnp.bfloat16 if encoder_out.dtype == jnp.bfloat16 else jnp.float32
    hidden = hidden.astype(mxu_dtype)

    w_enc = params["w_enc"].astype(mxu_dtype)                              # (E, A)
    # Fuse the two hidden-side projections into one (H, A+E) weight / bias.
    w_hidbeta = jnp.concatenate(
        [params["w_hid"], params["w_beta"]], axis=1).astype(mxu_dtype)     # (H, A+E)
    # b_enc folded into the hidden-attention bias (identical after broadcast over N);
    # b_comb dropped entirely (softmax shift invariance). Biases stay f32.
    b_hidbeta = jnp.concatenate(
        [params["b_hid"] + params["b_enc"], params["b_beta"]],
        axis=1).astype(jnp.float32)                                        # (1, A+E)
    # Combine weight passed lane-dense; kept f32 so the VPU combine stage is f32.
    w_comb_row = params["w_comb"].reshape(1, A).astype(jnp.float32)

    enc_isz = jnp.dtype(encoder_out.dtype).itemsize
    hid_isz = jnp.dtype(mxu_dtype).itemsize
    w_isz = jnp.dtype(mxu_dtype).itemsize
    out_isz = enc_isz

    enc_budget, row_cap, limit_cap = _generation_budgets()
    cands = _batch_tile_candidates(B)
    TB = batch_tile if batch_tile is not None else _pick_batch_tile(
        cands, B, N, E, enc_isz, enc_budget, row_cap)
    assert B % TB == 0

    est = _vmem_estimate(TB, N, E, H, A, enc_isz, hid_isz, w_isz, out_isz)
    # Jointly constrain the tile and the VMEM limit: shrink TB rather than
    # silently clamping the limit below what the tile needs.
    if batch_tile is None:
        while est > limit_cap:
            smaller = [d for d in cands if d < TB]
            if not smaller:
                break
            TB = max(smaller)
            est = _vmem_estimate(TB, N, E, H, A, enc_isz, hid_isz, w_isz, out_isz)
    vmem_limit = int(min(max(int(est * 1.25), 16 << 20), limit_cap))
    assert est <= vmem_limit, (
        f"attention tile (TB={TB}) needs ~{est >> 20} MiB VMEM, over the "
        f"{vmem_limit >> 20} MiB per-core limit for this TPU generation")

    grid = (B // TB,)

    # Grid-invariant blocks: constant index map, so Mosaic keeps them resident and
    # does not re-issue their DMA per step (default buffering kept for portability;
    # pl.Buffered(1) would drop the spare copy if VMEM gets tight).
    full = lambda shape: pl.BlockSpec(shape, lambda b: tuple(0 for _ in shape))

    out, alpha = pl.pallas_call(
        attention_kernel,
        out_shape=(
            jax.ShapeDtypeStruct((B, E), encoder_out.dtype),
            jax.ShapeDtypeStruct((B, N), jnp.float32),
        ),
        grid_spec=pltpu.PrefetchScalarGridSpec(
            num_scalar_prefetch=0,
            grid=grid,
            in_specs=[
                pl.BlockSpec((TB, N, E), lambda b: (b, 0, 0)),   # encoder_out
                pl.BlockSpec((TB, H), lambda b: (b, 0)),         # hidden
                full((E, A)),                                    # encoderAttentionLayer W
                full((H, AE)),                                   # fused [hiddenAttn | beta] W
                full((1, AE)),                                   # fused bias (f32)
                full((1, A)),                                    # combine weight row (f32)
            ],
            out_specs=[
                pl.BlockSpec((TB, E), lambda b: (b, 0)),
                pl.BlockSpec((TB, N), lambda b: (b, 0)),
            ],
        ),
        compiler_params=pltpu.CompilerParams(
            dimension_semantics=("parallel",),
            vmem_limit_bytes=vmem_limit),
    )(encoder_out, hidden, w_enc, w_hidbeta, b_hidbeta, w_comb_row)

    return out, alpha


def reference_forward(encoder_out, hidden, p):
    enc_att = encoder_out @ p["w_enc"] + p["b_enc"]
    hid_att = hidden @ p["w_hid"] + p["b_hid"]
    s = jnp.maximum(enc_att + hid_att[:, None, :], 0.0)
    comb = (s @ p["w_comb"] + p["b_comb"])[..., 0]
    alpha = jax.nn.softmax(comb, axis=1)
    weighted = jnp.sum(encoder_out * alpha[:, :, None], axis=1)
    beta_gate = jax.nn.sigmoid(hidden @ p["w_beta"] + p["b_beta"])
    return beta_gate * weighted, alpha


if __name__ == "__main__":
    B, N = 4, 8
    encoder_dim, hidden_dim, attention_dim = 32, 32, 32

    key = jax.random.PRNGKey(0)
    ks = jax.random.split(key, 10)

    # Deterministic synthetic parameters (stored as (in_dim, out_dim)).
    params = {
        "w_enc": jax.random.normal(ks[0], (encoder_dim, attention_dim), jnp.float32) * 0.1,
        "b_enc": jax.random.normal(ks[1], (1, attention_dim), jnp.float32) * 0.1,
        "w_hid": jax.random.normal(ks[2], (hidden_dim, attention_dim), jnp.float32) * 0.1,
        "b_hid": jax.random.normal(ks[3], (1, attention_dim), jnp.float32) * 0.1,
        "w_comb": jax.random.normal(ks[4], (attention_dim, 1), jnp.float32) * 0.1,
        "b_comb": jax.random.normal(ks[5], (1, 1), jnp.float32) * 0.1,
        "w_beta": jax.random.normal(ks[6], (hidden_dim, encoder_dim), jnp.float32) * 0.1,
        "b_beta": jax.random.normal(ks[7], (1, encoder_dim), jnp.float32) * 0.1,
    }

    encoder_out = jax.random.normal(ks[8], (B, N, encoder_dim), jnp.float32)
    hidden = jax.random.normal(ks[9], (B, hidden_dim), jnp.float32)

    weighted, alpha = attention_forward(encoder_out, hidden, params)
    jax.block_until_ready((weighted, alpha))

    # Verify against a plain-JAX reference of the PyTorch forward. The softmax
    # denominator is exact now, so the tolerance is tighter than before and the
    # attention rows must sum to 1.
    ref_w, ref_a = reference_forward(encoder_out, hidden, params)
    assert jnp.allclose(weighted, ref_w, atol=1e-3, rtol=1e-3), "weighted mismatch"
    assert jnp.allclose(alpha, ref_a, atol=1e-3, rtol=1e-3), "alpha mismatch"
    assert jnp.allclose(jnp.sum(alpha, axis=1), 1.0, atol=1e-5), "alpha not normalized"

    # bf16 streaming path: true bf16 x bf16 MXU dots with f32 accumulation
    # (halves HBM/VMEM for encoder_out and the large weights at real sizes).
    w_bf16, a_bf16 = attention_forward(
        encoder_out.astype(jnp.bfloat16), hidden.astype(jnp.bfloat16), params)
    jax.block_until_ready((w_bf16, a_bf16))
    assert jnp.allclose(w_bf16.astype(jnp.float32), ref_w, atol=1e-1, rtol=1e-1)
    assert jnp.allclose(a_bf16, ref_a, atol=5e-2, rtol=5e-2)

    print("KERNEL_OK")
</pallas_src>

<mosaic_0001>
module attributes {stable_mosaic.version = 11 : i64} {
  func.func @attention_kernel(%arg0: i32, %arg1: memref<4x8x32xf32, #tpu.memory_space<vmem>>, %arg2: memref<4x32xf32, #tpu.memory_space<vmem>>, %arg3: memref<32x32xf32, #tpu.memory_space<vmem>>, %arg4: memref<32x64xf32, #tpu.memory_space<vmem>>, %arg5: memref<1x64xf32, #tpu.memory_space<vmem>>, %arg6: memref<1x32xf32, #tpu.memory_space<vmem>>, %arg7: memref<4x32xf32, #tpu.memory_space<vmem>>, %arg8: memref<4x8xf32, #tpu.memory_space<vmem>>) attributes {dimension_semantics = [#tpu.dimension_semantics<parallel>], iteration_bounds = array<i64: 1>, scalar_prefetch = 0 : i64, scratch_operands = 0 : i64, tpu.core_type = #tpu.core_type<tc>, window_params = [{transform_indices = @transform_0, window_bounds = array<i64: 4, 8, 32>}, {transform_indices = @transform_1, window_bounds = array<i64: 4, 32>}, {pipeline_mode = #tpu.pipeline_mode<synchronous>, transform_indices = @transform_2, window_bounds = array<i64: 32, 32>}, {pipeline_mode = #tpu.pipeline_mode<synchronous>, transform_indices = @transform_3, window_bounds = array<i64: 32, 64>}, {pipeline_mode = #tpu.pipeline_mode<synchronous>, transform_indices = @transform_4, window_bounds = array<i64: 1, 64>}, {pipeline_mode = #tpu.pipeline_mode<synchronous>, transform_indices = @transform_5, window_bounds = array<i64: 1, 32>}, {transform_indices = @transform_6, window_bounds = array<i64: 4, 32>}, {transform_indices = @transform_7, window_bounds = array<i64: 4, 8>}]} {
    %c0 = arith.constant 0 : index
    %c0_0 = arith.constant 0 : index
    %c0_1 = arith.constant 0 : index
    %0 = vector.load %arg1[%c0, %c0_0, %c0_1] : memref<4x8x32xf32, #tpu.memory_space<vmem>>, vector<4x8x32xf32>
    %c0_2 = arith.constant 0 : index
    %c0_3 = arith.constant 0 : index
    %1 = vector.load %arg2[%c0_2, %c0_3] : memref<4x32xf32, #tpu.memory_space<vmem>>, vector<4x32xf32>
    %2 = vector.shape_cast %0 : vector<4x8x32xf32> to vector<32x32xf32>
    %c0_4 = arith.constant 0 : index
    %c0_5 = arith.constant 0 : index
    %3 = vector.load %arg3[%c0_4, %c0_5] : memref<32x32xf32, #tpu.memory_space<vmem>>, vector<32x32xf32>
    %cst = arith.constant dense<0.000000e+00> : vector<32x32xf32>
    %4 = tpu.matmul %2, %3, %cst {dimension_numbers = #tpu.dot_dimension_numbers<[1], [0], [0], [1], [0, 0, 1, 1], [], []>} : vector<32x32xf32>, vector<32x32xf32>, vector<32x32xf32> -> vector<32x32xf32>
    %5 = vector.shape_cast %4 : vector<32x32xf32> to vector<4x8x32xf32>
    %c0_6 = arith.constant 0 : index
    %c0_7 = arith.constant 0 : index
    %6 = vector.load %arg4[%c0_6, %c0_7] : memref<32x64xf32, #tpu.memory_space<vmem>>, vector<32x64xf32>
    %cst_8 = arith.constant dense<0.000000e+00> : vector<4x64xf32>
    %7 = tpu.matmul %1, %6, %cst_8 {dimension_numbers = #tpu.dot_dimension_numbers<[1], [0], [0], [1], [0, 0, 1, 1], [], []>} : vector<4x32xf32>, vector<32x64xf32>, vector<4x64xf32> -> vector<4x64xf32>
    %c0_9 = arith.constant 0 : index
    %c0_10 = arith.constant 0 : index
    %8 = vector.load %arg5[%c0_9, %c0_10] : memref<1x64xf32, #tpu.memory_space<vmem>>, vector<1x64xf32>
    %9 = vector.broadcast %8 : vector<1x64xf32> to vector<4x64xf32>
    %10 = arith.addf %7, %9 : vector<4x64xf32>
    %11 = vector.extract_strided_slice %10 {offsets = [0, 0], sizes = [4, 32], strides = [1, 1]} : vector<4x64xf32> to vector<4x32xf32>
    %12 = vector.extract_strided_slice %10 {offsets = [0, 32], sizes = [4, 32], strides = [1, 1]} : vector<4x64xf32> to vector<4x32xf32>
    %13 = vector.shape_cast %11 : vector<4x32xf32> to vector<4x1x32xf32>
    %14 = vector.broadcast %13 : vector<4x1x32xf32> to vector<4x8x32xf32>
    %15 = arith.addf %5, %14 : vector<4x8x32xf32>
    %cst_11 = arith.constant 0.000000e+00 : f32
    %16 = vector.broadcast %cst_11 : f32 to vector<4x8x32xf32>
    %17 = arith.maximumf %15, %16 : vector<4x8x32xf32>
    %c0_12 = arith.constant 0 : index
    %c0_13 = arith.constant 0 : index
    %18 = vector.load %arg6[%c0_12, %c0_13] : memref<1x32xf32, #tpu.memory_space<vmem>>, vector<1x32xf32>
    %19 = vector.shape_cast %18 : vector<1x32xf32> to vector<1x1x32xf32>
    %20 = vector.broadcast %19 : vector<1x1x32xf32> to vector<4x8x32xf32>
    %21 = arith.mulf %17, %20 : vector<4x8x32xf32>
    %cst_14 = arith.constant dense<0.000000e+00> : vector<4x8xf32>
    %22 = vector.multi_reduction <add>, %21, %cst_14 [2] : vector<4x8x32xf32> to vector<4x8xf32>
    %cst_15 = arith.constant dense<0xFF800000> : vector<4xf32>
    %23 = vector.multi_reduction <maximumf>, %22, %cst_15 [1] : vector<4x8xf32> to vector<4xf32>
    %24 = vector.shape_cast %23 : vector<4xf32> to vector<4x1xf32>
    %25 = vector.broadcast %24 : vector<4x1xf32> to vector<4x8xf32>
    %26 = arith.subf %22, %25 : vector<4x8xf32>
    %27 = math.exp %26 : vector<4x8xf32>
    %cst_16 = arith.constant dense<0.000000e+00> : vector<4xf32>
    %28 = vector.multi_reduction <add>, %27, %cst_16 [1] : vector<4x8xf32> to vector<4xf32>
    %29 = vector.shape_cast %28 : vector<4xf32> to vector<4x1xf32>
    %30 = vector.broadcast %29 : vector<4x1xf32> to vector<4x8xf32>
    %31 = arith.divf %27, %30 : vector<4x8xf32>
    %32 = vector.shape_cast %31 : vector<4x8xf32> to vector<4x1x8xf32>
    "tpu.trace_start"() <{level = 10 : i32, message = "bqn,bne->bqe"}> : () -> ()
    %cst_17 = arith.constant dense<0.000000e+00> : vector<4x1x32xf32>
    %33 = tpu.matmul %32, %0, %cst_17 {dimension_numbers = #tpu.dot_dimension_numbers<[2], [1], [1], [2], [0, 0, 0, 1, 1, 2], [0], [0]>} : vector<4x1x8xf32>, vector<4x8x32xf32>, vector<4x1x32xf32> -> vector<4x1x32xf32>
    "tpu.trace_stop"() : () -> ()
    %34 = vector.shape_cast %33 : vector<4x1x32xf32> to vector<4x32xf32>
    %35 = arith.negf %12 : vector<4x32xf32>
    %36 = math.exp %35 : vector<4x32xf32>
    %cst_18 = arith.constant 1.000000e+00 : f32
    %37 = vector.broadcast %cst_18 : f32 to vector<4x32xf32>
    %38 = arith.addf %37, %36 : vector<4x32xf32>
    %39 = arith.divf %37, %38 : vector<4x32xf32>
    %40 = arith.mulf %39, %34 : vector<4x32xf32>
    %c0_19 = arith.constant 0 : index
    %c0_20 = arith.constant 0 : index
    %41 = vector.load %arg7[%c0_19, %c0_20] : memref<4x32xf32, #tpu.memory_space<vmem>>, vector<4x32xf32>
    tpu.vector_store %arg7[%c0_19, %c0_20], %40 {strides = array<i32>} : memref<4x32xf32, #tpu.memory_space<vmem>>, vector<4x32xf32>,
    %c0_21 = arith.constant 0 : index
    %c0_22 = arith.constant 0 : index
    %42 = vector.load %arg8[%c0_21, %c0_22] : memref<4x8xf32, #tpu.memory_space<vmem>>, vector<4x8xf32>
    tpu.vector_store %arg8[%c0_21, %c0_22], %31 {strides = array<i32>} : memref<4x8xf32, #tpu.memory_space<vmem>>, vector<4x8xf32>,
    return
  }
  func.func @transform_0(%arg0: i32) -> (i32, i32, i32) {
    %c0_i32 = arith.constant 0 : i32
    %c0_i32_0 = arith.constant 0 : i32
    %c0_i32_1 = arith.constant 0 : i32
    return %arg0, %c0_i32, %c0_i32_0 : i32, i32, i32
  }
  func.func @transform_1(%arg0: i32) -> (i32, i32) {
    %c0_i32 = arith.constant 0 : i32
    %c0_i32_0 = arith.constant 0 : i32
    return %arg0, %c0_i32 : i32, i32
  }
  func.func @transform_2(%arg0: i32) -> (i32, i32) {
    %c0_i32 = arith.constant 0 : i32
    %c0_i32_0 = arith.constant 0 : i32
    %c0_i32_1 = arith.constant 0 : i32
    return %c0_i32, %c0_i32_0 : i32, i32
  }
  func.func @transform_3(%arg0: i32) -> (i32, i32) {
    %c0_i32 = arith.constant 0 : i32
    %c0_i32_0 = arith.constant 0 : i32
    %c0_i32_1 = arith.constant 0 : i32
    return %c0_i32, %c0_i32_0 : i32, i32
  }
  func.func @transform_4(%arg0: i32) -> (i32, i32) {
    %c0_i32 = arith.constant 0 : i32
    %c0_i32_0 = arith.constant 0 : i32
    %c0_i32_1 = arith.constant 0 : i32
    return %c0_i32, %c0_i32_0 : i32, i32
  }
  func.func @transform_5(%arg0: i32) -> (i32, i32) {
    %c0_i32 = arith.constant 0 : i32
    %c0_i32_0 = arith.constant 0 : i32
    %c0_i32_1 = arith.constant 0 : i32
    return %c0_i32, %c0_i32_0 : i32, i32
  }
  func.func @transform_6(%arg0: i32) -> (i32, i32) {
    %c0_i32 = arith.constant 0 : i32
    %c0_i32_0 = arith.constant 0 : i32
    return %arg0, %c0_i32 : i32, i32
  }
  func.func @transform_7(%arg0: i32) -> (i32, i32) {
    %c0_i32 = arith.constant 0 : i32
    %c0_i32_0 = arith.constant 0 : i32
    return %arg0, %c0_i32 : i32, i32
  }
}

</mosaic_0001>

<llo_original>
// kernel: tpu_custom_call.1
$region0: #{tpu_custom_call.1}
  #allocation0 [shape = 'u32[]', space=smem, size = 0x4, offset = 0x4, fixed_abs, tag = 'smem constant byte address 0x4 - core index']
  #allocation1 [shape = 'u32[72,128]{1,0:T(1,128)}', space=vmem, size = 0x9000, scoped, tag = 'internal scratch']
  %s0 = inlined_call_operand.hbm [shape: f32[4,8,32], index: 0, kind: input, shape index: {}]
  %s1 = inlined_call_operand.hbm [shape: f32[4,32], index: 1, kind: input, shape index: {}]
  %s2 = inlined_call_operand.hbm [shape: f32[32,32], index: 2, kind: input, shape index: {}]
  %s3 = inlined_call_operand.hbm [shape: f32[32,64], index: 3, kind: input, shape index: {}]
  %s4 = inlined_call_operand.vmem [shape: f32[1,64], index: 4, kind: input, shape index: {}]
  %s5 = inlined_call_operand.vmem [shape: f32[1,32], index: 5, kind: input, shape index: {}]
  %s6 = inlined_call_operand.hbm [shape: f32[4,32], index: 6, kind: output, shape index: {0}]
  %s7 = inlined_call_operand.hbm [shape: f32[4,8], index: 7, kind: output, shape index: {1}]
  %8 = xla_tuple %s6, %s7
  %s9 = sld [smem:[#allocation0]]
  $region58: #{tpu_custom_call.1} parent=0
    _
  %s11 = ssub.s32 1, %s9
  %s12 = scalar_select 0, %s11, %s9
  $region1: #{tpu_custom_call.1} parent=0
    #allocation2 [shape = 'u8[16384]{0}', space=vmem, size = 0x4000, scoped, tag = 'input window, operand 0, single buffered']
    #allocation3 [shape = 's32[1]{0}', space=sflag, size = 0x4, scoped, tag = 'scoped memory for tpu_custom_call.1']
    #allocation4 [shape = 's32[1]{0}', space=sflag, size = 0x4, scoped, tag = 'scoped memory for tpu_custom_call.1']
    #allocation5 [shape = 'u8[2048]{0}', space=vmem, size = 0x800, scoped, tag = 'input window, operand 1, single buffered']
    #allocation6 [shape = 's32[1]{0}', space=sflag, size = 0x4, scoped, tag = 'scoped memory for tpu_custom_call.1']
    #allocation7 [shape = 'u8[16384]{0}', space=vmem, size = 0x4000, scoped, tag = 'input window, operand 2, single buffered']
    #allocation8 [shape = 'u8[16384]{0}', space=vmem, size = 0x4000, scoped, tag = 'input window, operand 3, single buffered']
    #allocation9 [shape = 's32[1]{0}', space=sflag, size = 0x4, scoped, tag = 'scoped memory for tpu_custom_call.1']
    #allocation10 [shape = 'u8[2048]{0}', space=vmem, size = 0x800, scoped, tag = 'output window, operand 0, single buffered']
    #allocation11 [shape = 'u8[2048]{0}', space=vmem, size = 0x800, scoped, tag = 'output window, operand 1, single buffered']
    #allocation12 [shape = 's32[1]{0}', space=sflag, size = 0x4, scoped, tag = 'scoped memory for tpu_custom_call.1']
    %13 = vsyncpa [#allocation3], 0
    %14 = vsyncpa [#allocation6], 0
    %15 = vsyncpa [#allocation9], 0
    %16 = vsyncpa [#allocation4], 0
    %17 = vsyncpa [#allocation12], 0
    // Predicated region
    $region2: #{tpu_custom_call.1} parent=1 // pred_check
      _
    $region3: #{tpu_custom_call.1} parent=1 // pred_check_branch
      %19 = sbr.rel (0) target = $region5
    $region4: #{tpu_custom_call.1} parent=1 // pred_region
      %21 = vsyncadd [#allocation3], 0
      %s22 = sshll.u32 %s0, 4
      %s23 = int_to_ptr.hbm [resolvable:$true] %s22
      %s24 = sshll.u32 [#allocation2], 4
      %s25 = int_to_ptr.vmem [resolvable:$true] %s24
      %30 = dma.hbm_to_vmem [thread:$0]  %s23, 512, %s25, [#allocation3], 128, 128, 8
    $region5: #{tpu_custom_call.1} parent=1 // pred_fallthru
      _
    // Predicated region
    $region6: #{tpu_custom_call.1} parent=1 // pred_check
      _
    $region7: #{tpu_custom_call.1} parent=1 // pred_check_branch
      %32 = sbr.rel (0) target = $region9
    $region8: #{tpu_custom_call.1} parent=1 // pred_region
      %34 = vsyncadd [#allocation6], 0
      %s36 = sshll.u32 %s1, 4
      %s37 = int_to_ptr.hbm [resolvable:$true] %s36
      %s38 = sshll.u32 [#allocation5], 4
      %s39 = int_to_ptr.vmem [resolvable:$true] %s38
      %41 = dma.hbm_to_vmem [thread:$0]  %s37, 64, %s39, [#allocation6]
    $region9: #{tpu_custom_call.1} parent=1 // pred_fallthru
      _
    // Predicated region
    $region10: #{tpu_custom_call.1} parent=1 // pred_check
      _
    $region11: #{tpu_custom_call.1} parent=1 // pred_check_branch
      %43 = sbr.rel (0) target = $region13
    $region12: #{tpu_custom_call.1} parent=1 // pred_region
      %45 = vsyncadd [#allocation6], 0
      %s46 = sshll.u32 %s2, 4
      %s47 = int_to_ptr.hbm [resolvable:$true] %s46
      %s48 = sshll.u32 [#allocation7], 4
      %s49 = int_to_ptr.vmem [resolvable:$true] %s48
      %54 = dma.hbm_to_vmem [thread:$0]  %s47, 512, %s49, [#allocation6], 128, 128, 8
    $region13: #{tpu_custom_call.1} parent=1 // pred_fallthru
      _
    // Predicated region
    $region14: #{tpu_custom_call.1} parent=1 // pred_check
      _
    $region15: #{tpu_custom_call.1} parent=1 // pred_check_branch
      %56 = sbr.rel (0) target = $region17
    $region16: #{tpu_custom_call.1} parent=1 // pred_region
      %58 = vsyncadd [#allocation9], 0
      %s59 = sshll.u32 %s3, 4
      %s60 = int_to_ptr.hbm [resolvable:$true] %s59
      %s61 = sshll.u32 [#allocation8], 4
      %s62 = int_to_ptr.vmem [resolvable:$true] %s61
      %67 = dma.hbm_to_vmem [thread:$0]  %s60, 512, %s62, [#allocation9], 128, 128, 8
    $region17: #{tpu_custom_call.1} parent=1 // pred_fallthru
      _
    // Predicated region
    $region18: #{tpu_custom_call.1} parent=1 // pred_check
      _
    $region19: #{tpu_custom_call.1} parent=1 // pred_check_branch
      %69 = sbr.rel (0) target = $region21
    $region20: #{tpu_custom_call.1} parent=1 // pred_region
      _
    $region21: #{tpu_custom_call.1} parent=1 // pred_fallthru
      _
    // Predicated region
    $region22: #{tpu_custom_call.1} parent=1 // pred_check
      _
    $region23: #{tpu_custom_call.1} parent=1 // pred_check_branch
      %71 = sbr.rel (0) target = $region25
    $region24: #{tpu_custom_call.1} parent=1 // pred_region
      _
    $region25: #{tpu_custom_call.1} parent=1 // pred_fallthru
      _
    // Predicated region
    $region26: #{tpu_custom_call.1} parent=1 // pred_check
      _
    $region27: #{tpu_custom_call.1} parent=1 // pred_check_branch
      %73 = sbr.rel (0) target = $region29
    $region28: #{tpu_custom_call.1} parent=1 // pred_region
      %75 = dma.done [#allocation3], 512
    $region29: #{tpu_custom_call.1} parent=1 // pred_fallthru
      _
    // Predicated region
    $region30: #{tpu_custom_call.1} parent=1 // pred_check
      _
    $region31: #{tpu_custom_call.1} parent=1 // pred_check_branch
      %77 = sbr.rel (0) target = $region33
    $region32: #{tpu_custom_call.1} parent=1 // pred_region
      %79 = dma.done [#allocation6], 64
    $region33: #{tpu_custom_call.1} parent=1 // pred_fallthru
      _
    // Predicated region
    $region34: #{tpu_custom_call.1} parent=1 // pred_check
      _
    $region35: #{tpu_custom_call.1} parent=1 // pred_check_branch
      %81 = sbr.rel (0) target = $region37
    $region36: #{tpu_custom_call.1} parent=1 // pred_region
      %83 = dma.done [#allocation6], 512
    $region37: #{tpu_custom_call.1} parent=1 // pred_fallthru
      _
    // Predicated region
    $region38: #{tpu_custom_call.1} parent=1 // pred_check
      _
    $region39: #{tpu_custom_call.1} parent=1 // pred_check_branch
      %85 = sbr.rel (0) target = $region41
    $region40: #{tpu_custom_call.1} parent=1 // pred_region
      %87 = dma.done [#allocation9], 512
    $region41: #{tpu_custom_call.1} parent=1 // pred_fallthru
      _
    %v88 = vld [vmem:[#allocation2] sm:$0xff]
    %v89 = vld [vmem:[#allocation2 + $0x8] sm:$0xff]
    %v90 = vld [vmem:[#allocation2 + $0x10] sm:$0xff]
    %v91 = vld [vmem:[#allocation2 + $0x18] sm:$0xff]
    %v92 = vld [vmem:[#allocation5] sm:$0xf]
    %v93 = vld [vmem:[#allocation7] sm:$0xff]
    %v94 = vld [vmem:[#allocation7 + $0x8] sm:$0xff]
    %v95 = vld [vmem:[#allocation7 + $0x10] sm:$0xff]
    %v96 = vld [vmem:[#allocation7 + $0x18] sm:$0xff]
    %vm97 = vcmask 261120
    %v99 = vsel %vm97, %v88, 0
    %v102 = vsel %vm97, %v89, 0
    %v105 = vsel %vm97, %v90, 0
    %v108 = vsel %vm97, %v91, 0
    %110 = vmatpush.msra.mxu0 0.0
    %111 = vmatpush.msra.mxu0 0.0
    %112 = vmatpush.msra.mxu0 0.0
    %113 = vmatpush.msra.mxu0 0.0
    %114 = vmatpush.msra.mxu0 0.0
    %115 = vmatpush.msra.mxu0 0.0
    %116 = vmatpush.msra.mxu0 0.0
    %117 = vmatpush.msra.mxu0 0.0
    %118 = vmatpush.msra.mxu0 0.0
    %119 = vmatpush.msra.mxu0 0.0
    %120 = vmatpush.msra.mxu0 0.0
    %121 = vmatpush.msra.mxu0 0.0
    %122 = vmatpush.msra.mxu0 %v96
    %123 = vmatpush.msra.mxu0 %v95
    %124 = vmatpush.msra.mxu0 %v94
    %125 = vmatpush.msra.mxu0 %v93
    %126 = vmatmul.f32.gmra.mxu0 %v99
    %v127 = vpop.f32.mrf.mxu0
    %v128 = vadd.f32 0.0, %v127
    %129 = vmatmul.f32.gmra.mxu0 %v102
    %v130 = vpop.f32.mrf.mxu0
    %v131 = vadd.f32 0.0, %v130
    %132 = vmatmul.f32.gmra.mxu0 %v105
    %v133 = vpop.f32.mrf.mxu0
    %v134 = vadd.f32 0.0, %v133
    %135 = vmatmul.f32.gmra.mxu0 %v108
    %v136 = vpop.f32.mrf.mxu0
    %v137 = vadd.f32 0.0, %v136
    %138 = vdwg.mxu0
    %v139 = vld [vmem:[#allocation8] sm:$0xff]
    %v140 = vld [vmem:[#allocation8 + $0x8] sm:$0xff]
    %v141 = vld [vmem:[#allocation8 + $0x10] sm:$0xff]
    %v142 = vld [vmem:[#allocation8 + $0x18] sm:$0xff]
    %v143 = vld [vmem:[%s4] sm:$0x1]
    %v145 = vperm.slane %v143, 0
    %v148 = vsel %vm97, %v92, 0
    %150 = vmatpush.msra.mxu0 0.0
    %151 = vmatpush.msra.mxu0 0.0
    %152 = vmatpush.msra.mxu0 0.0
    %153 = vmatpush.msra.mxu0 0.0
    %154 = vmatpush.msra.mxu0 0.0
    %155 = vmatpush.msra.mxu0 0.0
    %156 = vmatpush.msra.mxu0 0.0
    %157 = vmatpush.msra.mxu0 0.0
    %158 = vmatpush.msra.mxu0 0.0
    %159 = vmatpush.msra.mxu0 0.0
    %160 = vmatpush.msra.mxu0 0.0
    %161 = vmatpush.msra.mxu0 0.0
    %162 = vmatpush.msra.mxu0 %v142
    %163 = vmatpush.msra.mxu0 %v141
    %164 = vmatpush.msra.mxu0 %v140
    %165 = vmatpush.msra.mxu0 %v139
    %166 = vmatmul.f32.gmra.mxu0 %v148
    %v167 = vpop.f32.mrf.mxu0
    %v168 = vadd.f32 %v145, %v167
    %169 = vdwg.mxu0
    %v171 = vrot.slane %v168, 1
    %v172 = vrot.slane %v168, 2
    %v173 = vrot.slane %v168, 3
    %v174 = vperm.slane %v168, 0
    %v175 = vperm.slane %v171, 0
    %v176 = vperm.slane %v172, 0
    %v177 = vperm.slane %v173, 0
    %v182 = vadd.f32 %v128, %v174
    %v183 = vadd.f32 %v131, %v175
    %v184 = vadd.f32 %v134, %v176
    %v185 = vadd.f32 %v137, %v177
    %v186 = vmax.f32 %v182, 0.0
    %v187 = vmax.f32 %v183, 0.0
    %v188 = vmax.f32 %v184, 0.0
    %v189 = vmax.f32 %v185, 0.0
    %v190 = vld [vmem:[%s5] sm:$0x1]
    %v192 = vperm.slane %v190, 0
    %v194 = vmul.f32 %v186, %v192
    %v195 = vmul.f32 %v187, %v192
    %v196 = vmul.f32 %v188, %v192
    %v197 = vmul.f32 %v189, %v192
    %v198 = vsel %vm97, %v194, 0.0
    %199 = vadd.xlane.f32.xlu0 %v198
    %v200 = vpop.xlane.xlu0 %199
    %v201 = vsel %vm97, %v195, 0.0
    %202 = vadd.xlane.f32.xlu0 %v201
    %v203 = vpop.xlane.xlu0 %202
    %v204 = vsel %vm97, %v196, 0.0
    %205 = vadd.xlane.f32.xlu0 %v204
    %v206 = vpop.xlane.xlu0 %205
    %v207 = vsel %vm97, %v197, 0.0
    %208 = vadd.xlane.f32.xlu0 %v207
    %v209 = vpop.xlane.xlu0 %208
    %v214 = vlaneseq
    %v215 = vand.u32 %v214, 127
    %v216 = vperm.slane %v200, %v215
    %v217 = vperm.slane %v203, %v215
    %v218 = vperm.slane %v206, %v215
    %v219 = vperm.slane %v209, %v215
    %vm220 = vcmask 1041409
    %v221 = vsel %vm220, %v217, %v216
    %vm222 = vcmask 1042434
    %v223 = vsel %vm222, %v218, %v221
    %vm224 = vcmask 1043459
    %v225 = vsel %vm224, %v219, %v223
    %vm227 = vcmask 60416
    %v228 = vsel %vm227, %v225, -inf
    %229 = vmax.xlane.f32.xlu0 %v228
    %v230 = vpop.xlane.xlu0 %229
    %v232 = vperm.slane %v230, 0
    %v233 = vperm.slane %v230, 1
    %v234 = vperm.slane %v230, 2
    %v235 = vperm.slane %v230, 3
    %v240 = vsub.f32 %v200, %v232
    %v241 = vsub.f32 %v203, %v233
    %v242 = vsub.f32 %v206, %v234
    %v243 = vsub.f32 %v209, %v235
    %v244 = vmul.f32 %v240, 1.442695
    %v245 = vpow.pop %v244
    %v246 = vmul.f32 %v241, 1.442695
    %v247 = vpow.pop %v246
    %v248 = vmul.f32 %v242, 1.442695
    %v249 = vpow.pop %v248
    %v250 = vmul.f32 %v243, 1.442695
    %v251 = vpow.pop %v250
    %256 = vset.pattern.permute.xlu0 0
    %257 = vperm.xlu0 %256, %v245
    %v258 = vpop.permute.xlu0 %257
    %259 = vset.pattern.permute.xlu0 0
    %260 = vperm.xlu0 %259, %v247
    %v261 = vpop.permute.xlu0 %260
    %262 = vset.pattern.permute.xlu0 0
    %263 = vperm.xlu0 %262, %v249
    %v264 = vpop.permute.xlu0 %263
    %265 = vset.pattern.permute.xlu0 0
    %266 = vperm.xlu0 %265, %v251
    %v267 = vpop.permute.xlu0 %266
    %v268 = vperm.slane %v258, %v215
    %v269 = vperm.slane %v261, %v215
    %v270 = vperm.slane %v264, %v215
    %v271 = vperm.slane %v267, %v215
    %v272 = vsel %vm220, %v269, %v268
    %v273 = vsel %vm222, %v270, %v272
    %v274 = vsel %vm224, %v271, %v273
    %v276 = vsel %vm227, %v274, 0.0
    %277 = vadd.xlane.f32.xlu0 %v276
    %v278 = vpop.xlane.xlu0 %277
    %v280 = vperm.slane %v278, 0
    %v281 = vperm.slane %v278, 1
    %v282 = vperm.slane %v278, 2
    %v283 = vperm.slane %v278, 3
    %v288 = vrcp.pop %v280
    %v289 = vmul.f32 %v280, %v288
    %v290 = vsub.f32 1.0, %v289
    %v291 = vmul.f32 %v288, %v290
    %v292 = vadd.f32 %v288, %v291
    %vm293 = vweird.f32 %v280
    %vm294 = vweird.f32 %v288
    %vm295 = vmor %vm293, %vm294
    %v296 = vsel %vm295, %v288, %v292
    %v297 = vand.u32 2147483647, %v280
    %vm298 = vcmp.eq.f32.partialorder %v297, 8.507059e+37
    %v299 = vand.u32 %v280, 2147483648
    %v300 = vor.u32 1.1754944e-38, %v299
    %v301 = vsel %vm298, %v300, %v296
    %v302 = vmul.f32 %v245, %v301
    %v303 = vrcp.pop %v281
    %v304 = vmul.f32 %v281, %v303
    %v305 = vsub.f32 1.0, %v304
    %v306 = vmul.f32 %v303, %v305
    %v307 = vadd.f32 %v303, %v306
    %vm308 = vweird.f32 %v281
    %vm309 = vweird.f32 %v303
    %vm310 = vmor %vm308, %vm309
    %v311 = vsel %vm310, %v303, %v307
    %v312 = vand.u32 2147483647, %v281
    %vm313 = vcmp.eq.f32.partialorder %v312, 8.507059e+37
    %v314 = vand.u32 %v281, 2147483648
    %v315 = vor.u32 1.1754944e-38, %v314
    %v316 = vsel %vm313, %v315, %v311
    %v317 = vmul.f32 %v247, %v316
    %v318 = vrcp.pop %v282
    %v319 = vmul.f32 %v282, %v318
    %v320 = vsub.f32 1.0, %v319
    %v321 = vmul.f32 %v318, %v320
    %v322 = vadd.f32 %v318, %v321
    %vm323 = vweird.f32 %v282
    %vm324 = vweird.f32 %v318
    %vm325 = vmor %vm323, %vm324
    %v326 = vsel %vm325, %v318, %v322
    %v327 = vand.u32 2147483647, %v282
    %vm328 = vcmp.eq.f32.partialorder %v327, 8.507059e+37
    %v329 = vand.u32 %v282, 2147483648
    %v330 = vor.u32 1.1754944e-38, %v329
    %v331 = vsel %vm328, %v330, %v326
    %v332 = vmul.f32 %v249, %v331
    %v333 = vrcp.pop %v283
    %v334 = vmul.f32 %v283, %v333
    %v335 = vsub.f32 1.0, %v334
    %v336 = vmul.f32 %v333, %v335
    %v337 = vadd.f32 %v333, %v336
    %vm338 = vweird.f32 %v283
    %vm339 = vweird.f32 %v333
    %vm340 = vmor %vm338, %vm339
    %v341 = vsel %vm340, %v333, %v337
    %v342 = vand.u32 2147483647, %v283
    %vm343 = vcmp.eq.f32.partialorder %v342, 8.507059e+37
    %v344 = vand.u32 %v283, 2147483648
    %v345 = vor.u32 1.1754944e-38, %v344
    %v346 = vsel %vm343, %v345, %v341
    %v347 = vmul.f32 %v251, %v346
    %349 = vset.pattern.permute.xlu0 0
    %350 = vperm.xlu0 %349, %v302
    %v351 = vpop.permute.xlu0 %350
    %v352 = vperm.slane %v351, %v215
    %vm353 = vcmask 64512
    %v354 = vsel %vm353, %v352, 0
    %356 = vmatpush.msra.mxu0 0.0
    %357 = vmatpush.msra.mxu0 0.0
    %358 = vmatpush.msra.mxu0 0.0
    %359 = vmatpush.msra.mxu0 0.0
    %360 = vmatpush.msra.mxu0 0.0
    %361 = vmatpush.msra.mxu0 0.0
    %362 = vmatpush.msra.mxu0 0.0
    %363 = vmatpush.msra.mxu0 0.0
    %364 = vmatpush.msra.mxu0 0.0
    %365 = vmatpush.msra.mxu0 0.0
    %366 = vmatpush.msra.mxu0 0.0
    %367 = vmatpush.msra.mxu0 0.0
    %368 = vmatpush.msra.mxu0 0.0
    %369 = vmatpush.msra.mxu0 0.0
    %370 = vmatpush.msra.mxu0 0.0
    %371 = vmatpush.msra.mxu0 %v88
    %372 = vmatmul.f32.gmra.mxu0 %v354
    %v373 = vpop.f32.mrf.mxu0
    %v374 = vadd.f32 0.0, %v373
    %375 = vdwg.mxu0
    %377 = vset.pattern.permute.xlu0 0
    %378 = vperm.xlu0 %377, %v317
    %v379 = vpop.permute.xlu0 %378
    %v380 = vperm.slane %v379, %v215
    %v381 = vsel %vm353, %v380, 0
    %383 = vmatpush.msra.mxu0 0.0
    %384 = vmatpush.msra.mxu0 0.0
    %385 = vmatpush.msra.mxu0 0.0
    %386 = vmatpush.msra.mxu0 0.0
    %387 = vmatpush.msra.mxu0 0.0
    %388 = vmatpush.msra.mxu0 0.0
    %389 = vmatpush.msra.mxu0 0.0
    %390 = vmatpush.msra.mxu0 0.0
    %391 = vmatpush.msra.mxu0 0.0
    %392 = vmatpush.msra.mxu0 0.0
    %393 = vmatpush.msra.mxu0 0.0
    %394 = vmatpush.msra.mxu0 0.0
    %395 = vmatpush.msra.mxu0 0.0
    %396 = vmatpush.msra.mxu0 0.0
    %397 = vmatpush.msra.mxu0 0.0
    %398 = vmatpush.msra.mxu0 %v89
    %399 = vmatmul.f32.gmra.mxu0 %v381
    %v400 = vpop.f32.mrf.mxu0
    %v401 = vadd.f32 0.0, %v400
    %402 = vdwg.mxu0
    %404 = vset.pattern.permute.xlu0 0
    %405 = vperm.xlu0 %404, %v332
    %v406 = vpop.permute.xlu0 %405
    %v407 = vperm.slane %v406, %v215
    %v408 = vsel %vm353, %v407, 0
    %410 = vmatpush.msra.mxu0 0.0
    %411 = vmatpush.msra.mxu0 0.0
    %412 = vmatpush.msra.mxu0 0.0
    %413 = vmatpush.msra.mxu0 0.0
    %414 = vmatpush.msra.mxu0 0.0
    %415 = vmatpush.msra.mxu0 0.0
    %416 = vmatpush.msra.mxu0 0.0
    %417 = vmatpush.msra.mxu0 0.0
    %418 = vmatpush.msra.mxu0 0.0
    %419 = vmatpush.msra.mxu0 0.0
    %420 = vmatpush.msra.mxu0 0.0
    %421 = vmatpush.msra.mxu0 0.0
    %422 = vmatpush.msra.mxu0 0.0
    %423 = vmatpush.msra.mxu0 0.0
    %424 = vmatpush.msra.mxu0 0.0
    %425 = vmatpush.msra.mxu0 %v90
    %426 = vmatmul.f32.gmra.mxu0 %v408
    %v427 = vpop.f32.mrf.mxu0
    %v428 = vadd.f32 0.0, %v427
    %429 = vdwg.mxu0
    %431 = vset.pattern.permute.xlu0 0
    %432 = vperm.xlu0 %431, %v347
    %v433 = vpop.permute.xlu0 %432
    %v434 = vperm.slane %v433, %v215
    %v435 = vsel %vm353, %v434, 0
    %437 = vmatpush.msra.mxu0 0.0
    %438 = vmatpush.msra.mxu0 0.0
    %439 = vmatpush.msra.mxu0 0.0
    %440 = vmatpush.msra.mxu0 0.0
    %441 = vmatpush.msra.mxu0 0.0
    %442 = vmatpush.msra.mxu0 0.0
    %443 = vmatpush.msra.mxu0 0.0
    %444 = vmatpush.msra.mxu0 0.0
    %445 = vmatpush.msra.mxu0 0.0
    %446 = vmatpush.msra.mxu0 0.0
    %447 = vmatpush.msra.mxu0 0.0
    %448 = vmatpush.msra.mxu0 0.0
    %449 = vmatpush.msra.mxu0 0.0
    %450 = vmatpush.msra.mxu0 0.0
    %451 = vmatpush.msra.mxu0 0.0
    %452 = vmatpush.msra.mxu0 %v91
    %453 = vmatmul.f32.gmra.mxu0 %v435
    %v454 = vpop.f32.mrf.mxu0
    %v455 = vadd.f32 0.0, %v454
    %456 = vdwg.mxu0
    %v457 = vxor.u32 %v168, 2147483648
    %v458 = vmul.f32 %v457, 1.442695
    %v459 = vpow.pop %v458
    %v460 = vadd.f32 %v459, 1.0
    %v461 = vrcp.pop %v460
    %v462 = vmul.f32 %v460, %v461
    %v463 = vsub.f32 1.0, %v462
    %v464 = vmul.f32 %v461, %v463
    %v465 = vadd.f32 %v461, %v464
    %vm466 = vweird.f32 %v460
    %vm467 = vweird.f32 %v461
    %vm468 = vmor %vm466, %vm467
    %v469 = vsel %vm468, %v461, %v465
    %v470 = vand.u32 2147483647, %v460
    %vm471 = vcmp.eq.f32.partialorder %v470, 8.507059e+37
    %v472 = vand.u32 %v460, 2147483648
    %v473 = vor.u32 1.1754944e-38, %v472
    %v474 = vsel %vm471, %v473, %v469
    %v475 = vmul.f32 1.0, %v474
    %v480 = vrot.slane %v401, 7
    %v481 = vsel %vm220, %v480, %v374
    %v482 = vrot.slane %v428, 6
    %v483 = vsel %vm222, %v482, %v481
    %v484 = vrot.slane %v455, 5
    %v485 = vsel %vm224, %v484, %v483
    %486 = vrot.lane.b32.xlu0 %v485, 32
    %v487 = vpop.permute.xlu0 %486
    %v489 = vmul.f32 %v475, %v487
    %491 = vrot.lane.b32.xlu0 %v489, 96
    %v492 = vpop.permute.xlu0 %491
    %vm494 = vcmask 257024
    %495 = vst.msk [vmem:[#allocation10] sm:$0xf] %vm494, %v492
    %v496 = vsel %vm220, %v380, %v352
    %v497 = vsel %vm222, %v407, %v496
    %v498 = vsel %vm224, %v434, %v497
    %500 = vst.msk [vmem:[#allocation11] sm:$0xf] %vm227, %v498
    // Predicated region
    $region42: #{tpu_custom_call.1} parent=1 // pred_check
      _
    $region43: #{tpu_custom_call.1} parent=1 // pred_check_branch
      %502 = sbr.rel (0) target = $region45
    $region44: #{tpu_custom_call.1} parent=1 // pred_region
      %504 = vsyncadd [#allocation4], 0
      %s506 = sshll.u32 [#allocation10], 4
      %s507 = int_to_ptr.vmem [resolvable:$true] %s506
      %s508 = sshll.u32 %s6, 4
      %s509 = int_to_ptr.hbm [resolvable:$true] %s508
      %511 = dma.vmem_to_hbm [thread:$0]  %s507, 64, %s509, [#allocation4]
    $region45: #{tpu_custom_call.1} parent=1 // pred_fallthru
      _
    // Predicated region
    $region46: #{tpu_custom_call.1} parent=1 // pred_check
      _
    $region47: #{tpu_custom_call.1} parent=1 // pred_check_branch
      %513 = sbr.rel (0) target = $region49
    $region48: #{tpu_custom_call.1} parent=1 // pred_region
      %515 = vsyncadd [#allocation12], 0
      %s517 = sshll.u32 [#allocation11], 4
      %s518 = int_to_ptr.vmem [resolvable:$true] %s517
      %s519 = sshll.u32 %s7, 4
      %s520 = int_to_ptr.hbm [resolvable:$true] %s519
      %522 = dma.vmem_to_hbm [thread:$0]  %s518, 64, %s520, [#allocation12]
    $region49: #{tpu_custom_call.1} parent=1 // pred_fallthru
      _
    // Predicated region
    $region50: #{tpu_custom_call.1} parent=1 // pred_check
      _
    $region51: #{tpu_custom_call.1} parent=1 // pred_check_branch
      %524 = sbr.rel (0) target = $region53
    $region52: #{tpu_custom_call.1} parent=1 // pred_region
      %526 = dma.done [#allocation4], 64
    $region53: #{tpu_custom_call.1} parent=1 // pred_fallthru
      _
    // Predicated region
    $region54: #{tpu_custom_call.1} parent=1 // pred_check
      _
    $region55: #{tpu_custom_call.1} parent=1 // pred_check_branch
      %528 = sbr.rel (0) target = $region57
    $region56: #{tpu_custom_call.1} parent=1 // pred_region
      %530 = dma.done [#allocation12], 64
    $region57: #{tpu_custom_call.1} parent=1 // pred_fallthru
      _
    %531 = vsyncpa [#allocation3], 1
    %532 = vsyncpa [#allocation6], 1
    %533 = vsyncpa [#allocation9], 1
    %534 = vsyncpa [#allocation4], 1
    %535 = vsyncpa [#allocation12], 1

</llo_original>
